<compile_context>
chip_gen: v5e
topology: v5e:2x2
jax: 0.10.0
libtpu: 0.0.40
codegen_flags: <defaults>
</compile_context>

<pallas_src>
import functools

import jax
import jax.numpy as jnp
from jax import lax
from jax.experimental import pallas as pl
from jax.experimental.pallas import tpu as pltpu

EPS = 1e-6          # MAG epsilon
LN_EPS = 1e-5       # torch.nn.LayerNorm default eps
BETA_SHIFT = 0.5    # args.beta_shift

# TODO(synk): AlignSubNet (args.need_aligned=True path) is not implemented.


def _round_up(x, m):
    return (x + m - 1) // m * m


def _mag_kernel(text_ref, vis_ref, aco_ref,
                wt_ref, wv_ref, wa_ref,
                bv_ref, ba_ref,
                gamma_ref, beta_ref,
                out_ref, *, dt, dt_p, beta_shift):
    """One row tile.

    text_ref : [tm, Dt_p]   text in its incoming dtype (zero-padded lanes)
    vis_ref  : [tm, Dv_p]   visual, GEMM dtype (zero-padded lanes)
    aco_ref  : [tm, Da_p]   acoustic, GEMM dtype (zero-padded lanes)
    wt_ref   : [Dt_p, 2*Dt_p]  packed [W_hv_text.T | W_ha_text.T]
    wv_ref   : [Dv_p, 2*Dt_p]  packed [W_hv_vis.T  | W_v.T]
    wa_ref   : [Da_p, 2*Dt_p]  packed [W_ha_aco.T  | W_a.T]
    bv_ref   : [1, 2*Dt_p]     packed [b_hv | b_v]   (f32)
    ba_ref   : [1, 2*Dt_p]     packed [b_ha | b_a]   (f32)
    gamma_ref/beta_ref : [1, Dt_p]  (f32)
    out_ref  : [tm, Dt_p]
    """
    gemm_dtype = wt_ref.dtype

    text_in = text_ref[...]
    text = text_in.astype(jnp.float32)          # f32 copy for norms / residual / LN

    # Three lane-packed GEMMs with f32 accumulation.
    t_out = jnp.dot(text_in.astype(gemm_dtype), wt_ref[...],
                    preferred_element_type=jnp.float32)
    v_out = jnp.dot(vis_ref[...], wv_ref[...],
                    preferred_element_type=jnp.float32) + bv_ref[...]
    a_out = jnp.dot(aco_ref[...], wa_ref[...],
                    preferred_element_type=jnp.float32) + ba_ref[...]

    # weight_v = relu(W_hv([vis|text])), v_proj = W_v(vis)   (128-aligned slices)
    h_m = jnp.maximum(t_out[:, :dt_p] + v_out[:, :dt_p], 0.0) * v_out[:, dt_p:]
    # + weight_a * a_proj
    h_m = h_m + jnp.maximum(t_out[:, dt_p:] + a_out[:, :dt_p], 0.0) * a_out[:, dt_p:]

    # Per-row L2 norms (padded lanes are exactly zero -> sums are correct).
    em_norm = jnp.sqrt(jnp.sum(text * text, axis=-1, keepdims=True))
    hm_norm = jnp.sqrt(jnp.sum(h_m * h_m, axis=-1, keepdims=True))
    hm_norm = jnp.where(hm_norm == 0.0, jnp.ones_like(hm_norm), hm_norm)

    # Exact divide kept (one scalar per row) for accuracy.
    thresh = em_norm / (hm_norm + EPS) * beta_shift
    alpha = jnp.minimum(thresh, 1.0)

    x = alpha * h_m + text                      # padded lanes stay 0

    # LayerNorm over the *real* hidden dim (biased variance, like torch).
    inv_d = 1.0 / dt
    mean = jnp.sum(x, axis=-1, keepdims=True) * inv_d
    if dt == dt_p:
        xc = x - mean
    else:
        lane = lax.broadcasted_iota(jnp.int32, (1, dt_p), 1)
        mask = (lane < dt).astype(jnp.float32)
        xc = (x - mean) * mask                  # zero padded lanes before var sum
    var = jnp.sum(xc * xc, axis=-1, keepdims=True) * inv_d
    y = xc * lax.rsqrt(var + LN_EPS)
    y = y * gamma_ref[...] + beta_ref[...]

    # Dropout is identity in eval mode.
    out_ref[...] = y.astype(out_ref.dtype)


def pack_mag_params(params, *, text_dim, video_dim, audio_dim,
                    dtype=jnp.bfloat16):
    """One-time weight packing/transposition (do NOT call per forward).

    `dtype` is the MXU operand dtype (bf16 recommended on v5e/v6e/v7x).
    Biases / LayerNorm params stay f32.
    """
    Dt, Dv, Da = text_dim, video_dim, audio_dim
    Dt_p = _round_up(Dt, 128)
    Dv_p = _round_up(Dv, 128)
    Da_p = _round_up(Da, 128)

    W_hv, b_hv = params["W_hv"], params["b_hv"]
    W_ha, b_ha = params["W_ha"], params["b_ha"]
    W_v, b_v = params["W_v"], params["b_v"]
    W_a, b_a = params["W_a"], params["b_a"]
    gamma, beta = params["gamma"], params["beta"]

    # text @ wt -> [text->weight_v | text->weight_a]
    wt = jnp.zeros((Dt_p, 2 * Dt_p), dtype)
    wt = wt.at[:Dt, :Dt].set(W_hv[:, Dv:].T.astype(dtype))
    wt = wt.at[:Dt, Dt_p:Dt_p + Dt].set(W_ha[:, Da:].T.astype(dtype))

    # visual @ wv -> [vis->weight_v | v_proj]
    wv = jnp.zeros((Dv_p, 2 * Dt_p), dtype)
    wv = wv.at[:Dv, :Dt].set(W_hv[:, :Dv].T.astype(dtype))
    wv = wv.at[:Dv, Dt_p:Dt_p + Dt].set(W_v.T.astype(dtype))

    # acoustic @ wa -> [aco->weight_a | a_proj]
    wa = jnp.zeros((Da_p, 2 * Dt_p), dtype)
    wa = wa.at[:Da, :Dt].set(W_ha[:, :Da].T.astype(dtype))
    wa = wa.at[:Da, Dt_p:Dt_p + Dt].set(W_a.T.astype(dtype))

    bv = jnp.zeros((1, 2 * Dt_p), jnp.float32)
    bv = bv.at[0, :Dt].set(b_hv.astype(jnp.float32))
    bv = bv.at[0, Dt_p:Dt_p + Dt].set(b_v.astype(jnp.float32))
    ba = jnp.zeros((1, 2 * Dt_p), jnp.float32)
    ba = ba.at[0, :Dt].set(b_ha.astype(jnp.float32))
    ba = ba.at[0, Dt_p:Dt_p + Dt].set(b_a.astype(jnp.float32))

    gamma_p = jnp.zeros((1, Dt_p), jnp.float32).at[0, :Dt].set(gamma.astype(jnp.float32))
    beta_p = jnp.zeros((1, Dt_p), jnp.float32).at[0, :Dt].set(beta.astype(jnp.float32))

    return {
        "wt": wt, "wv": wv, "wa": wa, "bv": bv, "ba": ba,
        "gamma": gamma_p, "beta": beta_p,
        "dims": (Dt, Dv, Da, Dt_p, Dv_p, Da_p),
    }


def _default_vmem_limit():
    try:
        cap = int(pltpu.get_tpu_info().vmem_capacity_bytes)
    except Exception:
        cap = 64 * 1024 * 1024      # conservative fallback (v7x per-core size)
    # 3/4 of per-core VMEM, capped: ~48 MiB on v7x, ~96 MiB on v5e/v6e.
    return min((cap * 3) // 4, 100 * 1024 * 1024)


def _pad2d(x, rows, cols):
    r, c = x.shape
    if r == rows and c == cols:
        return x
    return jnp.pad(x, ((0, rows - r), (0, cols - c)))


def mag_forward(text, visual, acoustic, packed, *, beta_shift=BETA_SHIFT,
                tm=None, vmem_limit_bytes=None):
    """text: [B,S,Dt], visual: [B,S,Dv], acoustic: [B,S,Da] -> [B,S,Dt]."""
    B, S, Dt = text.shape
    Dv = visual.shape[-1]
    Da = acoustic.shape[-1]
    pDt, pDv, pDa, Dt_p, Dv_p, Da_p = packed["dims"]
    assert (Dt, Dv, Da) == (pDt, pDv, pDa)

    gemm_dtype = packed["wt"].dtype
    out_dtype = text.dtype

    N = B * S
    min_itemsize = min(jnp.dtype(text.dtype).itemsize, jnp.dtype(gemm_dtype).itemsize)
    sub = {4: 8, 2: 16, 1: 32}.get(min_itemsize, 8)   # sublane multiple

    # Row tile: default 512 (multiple of 256 -> fills v6e 256x256 MXU, 128 on
    # v5e); collapse to a single grid step for small N (no pipeline split).
    if tm is None:
        tm = 512
    tm = max(_round_up(tm, sub), sub)
    if N < 2 * tm:
        tm = max(_round_up(N, sub), sub)
    N_p = _round_up(N, tm)
    grid = (N_p // tm,)

    # text stays in its incoming dtype (f32 tail accuracy); zero-copy when
    # already row/lane aligned.  visual/acoustic are small: pad + cast to the
    # GEMM dtype in the wrapper.
    text_p = _pad2d(text.reshape(N, Dt), N_p, Dt_p)
    vis_p = _pad2d(visual.reshape(N, Dv).astype(gemm_dtype), N_p, Dv_p)
    aco_p = _pad2d(acoustic.reshape(N, Da).astype(gemm_dtype), N_p, Da_p)

    if vmem_limit_bytes is None:
        vmem_limit_bytes = _default_vmem_limit()

    row_spec = lambda d: pl.BlockSpec((tm, d), lambda i: (i, 0))
    # Constant weight slabs: fetched once, single-buffered (no 2x VMEM).
    w_spec = lambda r: pl.BlockSpec((r, 2 * Dt_p), lambda i: (0, 0),
                                    pipeline_mode=pl.Buffered(1))
    vec_spec = lambda d: pl.BlockSpec((1, d), lambda i: (0, 0))

    out = pl.pallas_call(
        functools.partial(_mag_kernel, dt=Dt, dt_p=Dt_p,
                          beta_shift=float(beta_shift)),
        out_shape=jax.ShapeDtypeStruct((N_p, Dt_p), out_dtype),
        grid=grid,
        in_specs=[
            row_spec(Dt_p),              # text
            row_spec(Dv_p),              # visual
            row_spec(Da_p),              # acoustic
            w_spec(Dt_p),                # wt
            w_spec(Dv_p),                # wv
            w_spec(Da_p),                # wa
            vec_spec(2 * Dt_p),          # bv
            vec_spec(2 * Dt_p),          # ba
            vec_spec(Dt_p),              # gamma
            vec_spec(Dt_p),              # beta
        ],
        out_specs=row_spec(Dt_p),
        compiler_params=pltpu.CompilerParams(
            dimension_semantics=("parallel",),
            vmem_limit_bytes=int(vmem_limit_bytes),
        ),
    )(text_p, vis_p, aco_p, packed["wt"], packed["wv"], packed["wa"],
      packed["bv"], packed["ba"], packed["gamma"], packed["beta"])

    # Skip the extra slice/copy in the common aligned case (BERT: Dt=768).
    if N_p == N and Dt_p == Dt:
        return out.reshape(B, S, Dt)
    return out[:N, :Dt].reshape(B, S, Dt)


def _reference(text, visual, acoustic, params, beta_shift=BETA_SHIFT):
    """Pure-JAX reference mirroring the PyTorch forward (eval mode)."""
    W_hv, b_hv = params["W_hv"], params["b_hv"]
    W_ha, b_ha = params["W_ha"], params["b_ha"]
    W_v, b_v = params["W_v"], params["b_v"]
    W_a, b_a = params["W_a"], params["b_a"]
    gamma, beta = params["gamma"], params["beta"]

    weight_v = jax.nn.relu(jnp.concatenate((visual, text), -1) @ W_hv.T + b_hv)
    weight_a = jax.nn.relu(jnp.concatenate((acoustic, text), -1) @ W_ha.T + b_ha)
    h_m = weight_v * (visual @ W_v.T + b_v) + weight_a * (acoustic @ W_a.T + b_a)
    em_norm = jnp.linalg.norm(text, axis=-1)
    hm_norm = jnp.linalg.norm(h_m, axis=-1)
    hm_norm = jnp.where(hm_norm == 0, 1.0, hm_norm)
    thresh = em_norm / (hm_norm + EPS) * beta_shift
    alpha = jnp.minimum(thresh, 1.0)[..., None]
    x = alpha * h_m + text
    mean = jnp.mean(x, -1, keepdims=True)
    var = jnp.mean((x - mean) ** 2, -1, keepdims=True)
    return ((x - mean) / jnp.sqrt(var + LN_EPS)) * gamma + beta


if __name__ == "__main__":
    # Small shapes: batch=2, seq=8, text_feat_dim (= hidden_size)=32,
    # video_feat_dim=16, audio_feat_dim=16.
    B, S = 2, 8
    Dt, Dv, Da = 32, 16, 16

    key = jax.random.PRNGKey(0)
    ks = jax.random.split(key, 12)
    scale = 0.05

    params = {
        "W_hv": scale * jax.random.normal(ks[0], (Dt, Dv + Dt), jnp.float32),
        "b_hv": scale * jax.random.normal(ks[1], (Dt,), jnp.float32),
        "W_ha": scale * jax.random.normal(ks[2], (Dt, Da + Dt), jnp.float32),
        "b_ha": scale * jax.random.normal(ks[3], (Dt,), jnp.float32),
        "W_v": scale * jax.random.normal(ks[4], (Dt, Dv), jnp.float32),
        "b_v": scale * jax.random.normal(ks[5], (Dt,), jnp.float32),
        "W_a": scale * jax.random.normal(ks[6], (Dt, Da), jnp.float32),
        "b_a": scale * jax.random.normal(ks[7], (Dt,), jnp.float32),
        "gamma": jnp.ones((Dt,), jnp.float32),
        "beta": jnp.zeros((Dt,), jnp.float32),
    }

    text = jax.random.normal(ks[8], (B, S, Dt), jnp.float32)
    visual = jax.random.normal(ks[9], (B, S, Dv), jnp.float32)
    acoustic = jax.random.normal(ks[10], (B, S, Da), jnp.float32)

    ref = _reference(text, visual, acoustic, params)

    # Recommended perf path: bf16 MXU operands, f32 accumulation + f32 tail.
    packed_bf16 = pack_mag_params(params, text_dim=Dt, video_dim=Dv,
                                  audio_dim=Da, dtype=jnp.bfloat16)
    out_bf16 = jax.block_until_ready(
        mag_forward(text, visual, acoustic, packed_bf16))
    assert out_bf16.shape == (B, S, Dt)
    assert jnp.allclose(out_bf16, ref, atol=1e-2, rtol=1e-2), (
        float(jnp.max(jnp.abs(out_bf16 - ref))))

    # Max-accuracy path: f32 MXU operands.
    packed_f32 = pack_mag_params(params, text_dim=Dt, video_dim=Dv,
                                 audio_dim=Da, dtype=jnp.float32)
    out_f32 = jax.block_until_ready(
        mag_forward(text, visual, acoustic, packed_f32))
    assert out_f32.shape == (B, S, Dt)
    assert jnp.allclose(out_f32, ref, atol=1e-4, rtol=1e-4), (
        float(jnp.max(jnp.abs(out_f32 - ref))))

    print("KERNEL_OK")
</pallas_src>

<mosaic_0001>
module attributes {stable_mosaic.version = 11 : i64} {
  func.func @_mag_kernel(%arg0: i32, %arg1: memref<16x128xf32, #tpu.memory_space<vmem>>, %arg2: memref<16x128xbf16, #tpu.memory_space<vmem>>, %arg3: memref<16x128xbf16, #tpu.memory_space<vmem>>, %arg4: memref<128x256xbf16, #tpu.memory_space<vmem>>, %arg5: memref<128x256xbf16, #tpu.memory_space<vmem>>, %arg6: memref<128x256xbf16, #tpu.memory_space<vmem>>, %arg7: memref<1x256xf32, #tpu.memory_space<vmem>>, %arg8: memref<1x256xf32, #tpu.memory_space<vmem>>, %arg9: memref<1x128xf32, #tpu.memory_space<vmem>>, %arg10: memref<1x128xf32, #tpu.memory_space<vmem>>, %arg11: memref<16x128xf32, #tpu.memory_space<vmem>>) attributes {dimension_semantics = [#tpu.dimension_semantics<parallel>], iteration_bounds = array<i64: 1>, scalar_prefetch = 0 : i64, scratch_operands = 0 : i64, tpu.core_type = #tpu.core_type<tc>, window_params = [{transform_indices = @transform_0, window_bounds = array<i64: 16, 128>}, {transform_indices = @transform_1, window_bounds = array<i64: 16, 128>}, {transform_indices = @transform_2, window_bounds = array<i64: 16, 128>}, {pipeline_mode = #tpu.pipeline_mode<synchronous>, transform_indices = @transform_3, window_bounds = array<i64: 128, 256>}, {pipeline_mode = #tpu.pipeline_mode<synchronous>, transform_indices = @transform_4, window_bounds = array<i64: 128, 256>}, {pipeline_mode = #tpu.pipeline_mode<synchronous>, transform_indices = @transform_5, window_bounds = array<i64: 128, 256>}, {pipeline_mode = #tpu.pipeline_mode<synchronous>, transform_indices = @transform_6, window_bounds = array<i64: 1, 256>}, {pipeline_mode = #tpu.pipeline_mode<synchronous>, transform_indices = @transform_7, window_bounds = array<i64: 1, 256>}, {pipeline_mode = #tpu.pipeline_mode<synchronous>, transform_indices = @transform_8, window_bounds = array<i64: 1, 128>}, {pipeline_mode = #tpu.pipeline_mode<synchronous>, transform_indices = @transform_9, window_bounds = array<i64: 1, 128>}, {transform_indices = @transform_10, window_bounds = array<i64: 16, 128>}]} {
    %c0 = arith.constant 0 : index
    %c0_0 = arith.constant 0 : index
    %0 = vector.load %arg1[%c0, %c0_0] : memref<16x128xf32, #tpu.memory_space<vmem>>, vector<16x128xf32>
    %1 = arith.truncf %0 : vector<16x128xf32> to vector<16x128xbf16>
    %c0_1 = arith.constant 0 : index
    %c0_2 = arith.constant 0 : index
    %2 = vector.load %arg4[%c0_1, %c0_2] : memref<128x256xbf16, #tpu.memory_space<vmem>>, vector<128x256xbf16>
    %cst = arith.constant dense<0.000000e+00> : vector<16x256xf32>
    %3 = tpu.matmul %1, %2, %cst {dimension_numbers = #tpu.dot_dimension_numbers<[1], [0], [0], [1], [0, 0, 1, 1], [], []>} : vector<16x128xbf16>, vector<128x256xbf16>, vector<16x256xf32> -> vector<16x256xf32>
    %c0_3 = arith.constant 0 : index
    %c0_4 = arith.constant 0 : index
    %4 = vector.load %arg2[%c0_3, %c0_4] : memref<16x128xbf16, #tpu.memory_space<vmem>>, vector<16x128xbf16>
    %c0_5 = arith.constant 0 : index
    %c0_6 = arith.constant 0 : index
    %5 = vector.load %arg5[%c0_5, %c0_6] : memref<128x256xbf16, #tpu.memory_space<vmem>>, vector<128x256xbf16>
    %cst_7 = arith.constant dense<0.000000e+00> : vector<16x256xf32>
    %6 = tpu.matmul %4, %5, %cst_7 {dimension_numbers = #tpu.dot_dimension_numbers<[1], [0], [0], [1], [0, 0, 1, 1], [], []>} : vector<16x128xbf16>, vector<128x256xbf16>, vector<16x256xf32> -> vector<16x256xf32>
    %c0_8 = arith.constant 0 : index
    %c0_9 = arith.constant 0 : index
    %7 = vector.load %arg7[%c0_8, %c0_9] : memref<1x256xf32, #tpu.memory_space<vmem>>, vector<1x256xf32>
    %8 = vector.broadcast %7 : vector<1x256xf32> to vector<16x256xf32>
    %9 = arith.addf %6, %8 : vector<16x256xf32>
    %c0_10 = arith.constant 0 : index
    %c0_11 = arith.constant 0 : index
    %10 = vector.load %arg3[%c0_10, %c0_11] : memref<16x128xbf16, #tpu.memory_space<vmem>>, vector<16x128xbf16>
    %c0_12 = arith.constant 0 : index
    %c0_13 = arith.constant 0 : index
    %11 = vector.load %arg6[%c0_12, %c0_13] : memref<128x256xbf16, #tpu.memory_space<vmem>>, vector<128x256xbf16>
    %cst_14 = arith.constant dense<0.000000e+00> : vector<16x256xf32>
    %12 = tpu.matmul %10, %11, %cst_14 {dimension_numbers = #tpu.dot_dimension_numbers<[1], [0], [0], [1], [0, 0, 1, 1], [], []>} : vector<16x128xbf16>, vector<128x256xbf16>, vector<16x256xf32> -> vector<16x256xf32>
    %c0_15 = arith.constant 0 : index
    %c0_16 = arith.constant 0 : index
    %13 = vector.load %arg8[%c0_15, %c0_16] : memref<1x256xf32, #tpu.memory_space<vmem>>, vector<1x256xf32>
    %14 = vector.broadcast %13 : vector<1x256xf32> to vector<16x256xf32>
    %15 = arith.addf %12, %14 : vector<16x256xf32>
    %16 = vector.extract_strided_slice %3 {offsets = [0, 0], sizes = [16, 128], strides = [1, 1]} : vector<16x256xf32> to vector<16x128xf32>
    %17 = vector.extract_strided_slice %9 {offsets = [0, 0], sizes = [16, 128], strides = [1, 1]} : vector<16x256xf32> to vector<16x128xf32>
    %18 = arith.addf %16, %17 : vector<16x128xf32>
    %cst_17 = arith.constant 0.000000e+00 : f32
    %19 = vector.broadcast %cst_17 : f32 to vector<16x128xf32>
    %20 = arith.maximumf %18, %19 : vector<16x128xf32>
    %21 = vector.extract_strided_slice %9 {offsets = [0, 128], sizes = [16, 128], strides = [1, 1]} : vector<16x256xf32> to vector<16x128xf32>
    %22 = arith.mulf %20, %21 : vector<16x128xf32>
    %23 = vector.extract_strided_slice %3 {offsets = [0, 128], sizes = [16, 128], strides = [1, 1]} : vector<16x256xf32> to vector<16x128xf32>
    %24 = vector.extract_strided_slice %15 {offsets = [0, 0], sizes = [16, 128], strides = [1, 1]} : vector<16x256xf32> to vector<16x128xf32>
    %25 = arith.addf %23, %24 : vector<16x128xf32>
    %cst_18 = arith.constant 0.000000e+00 : f32
    %26 = vector.broadcast %cst_18 : f32 to vector<16x128xf32>
    %27 = arith.maximumf %25, %26 : vector<16x128xf32>
    %28 = vector.extract_strided_slice %15 {offsets = [0, 128], sizes = [16, 128], strides = [1, 1]} : vector<16x256xf32> to vector<16x128xf32>
    %29 = arith.mulf %27, %28 : vector<16x128xf32>
    %30 = arith.addf %22, %29 : vector<16x128xf32>
    %31 = arith.mulf %0, %0 : vector<16x128xf32>
    %cst_19 = arith.constant dense<0.000000e+00> : vector<16xf32>
    %32 = vector.multi_reduction <add>, %31, %cst_19 [1] : vector<16x128xf32> to vector<16xf32>
    %33 = vector.shape_cast %32 : vector<16xf32> to vector<16x1xf32>
    %34 = math.sqrt %33 : vector<16x1xf32>
    %35 = arith.mulf %30, %30 : vector<16x128xf32>
    %cst_20 = arith.constant dense<0.000000e+00> : vector<16xf32>
    %36 = vector.multi_reduction <add>, %35, %cst_20 [1] : vector<16x128xf32> to vector<16xf32>
    %37 = vector.shape_cast %36 : vector<16xf32> to vector<16x1xf32>
    %38 = math.sqrt %37 : vector<16x1xf32>
    %cst_21 = arith.constant 0.000000e+00 : f32
    %39 = vector.broadcast %cst_21 : f32 to vector<16x1xf32>
    %40 = arith.cmpf oeq, %38, %39 : vector<16x1xf32>
    %cst_22 = arith.constant 1.000000e+00 : f32
    %41 = vector.broadcast %cst_22 : f32 to vector<16x1xf32>
    %42 = arith.select %40, %41, %38 : vector<16x1xi1>, vector<16x1xf32>
    %cst_23 = arith.constant 9.99999997E-7 : f32
    %43 = vector.broadcast %cst_23 : f32 to vector<16x1xf32>
    %44 = arith.addf %42, %43 : vector<16x1xf32>
    %45 = arith.divf %34, %44 : vector<16x1xf32>
    %cst_24 = arith.constant 5.000000e-01 : f32
    %46 = vector.broadcast %cst_24 : f32 to vector<16x1xf32>
    %47 = arith.mulf %45, %46 : vector<16x1xf32>
    %cst_25 = arith.constant 1.000000e+00 : f32
    %48 = vector.broadcast %cst_25 : f32 to vector<16x1xf32>
    %49 = arith.minimumf %47, %48 : vector<16x1xf32>
    %50 = vector.broadcast %49 : vector<16x1xf32> to vector<16x128xf32>
    %51 = arith.mulf %50, %30 : vector<16x128xf32>
    %52 = arith.addf %51, %0 : vector<16x128xf32>
    %cst_26 = arith.constant dense<0.000000e+00> : vector<16xf32>
    %53 = vector.multi_reduction <add>, %52, %cst_26 [1] : vector<16x128xf32> to vector<16xf32>
    %54 = vector.shape_cast %53 : vector<16xf32> to vector<16x1xf32>
    %cst_27 = arith.constant 3.125000e-02 : f32
    %55 = vector.broadcast %cst_27 : f32 to vector<16x1xf32>
    %56 = arith.mulf %54, %55 : vector<16x1xf32>
    %57 = tpu.iota {dimensions = array<i32: 1>} : vector<1x128xi32>
    %c32_i32 = arith.constant 32 : i32
    %58 = vector.broadcast %c32_i32 : i32 to vector<1x128xi32>
    %59 = arith.cmpi slt, %57, %58 : vector<1x128xi32>
    %60 = arith.extui %59 : vector<1x128xi1> to vector<1x128xi32>
    %61 = arith.sitofp %60 : vector<1x128xi32> to vector<1x128xf32>
    %62 = vector.broadcast %56 : vector<16x1xf32> to vector<16x128xf32>
    %63 = arith.subf %52, %62 : vector<16x128xf32>
    %64 = vector.broadcast %61 : vector<1x128xf32> to vector<16x128xf32>
    %65 = arith.mulf %63, %64 : vector<16x128xf32>
    %66 = arith.mulf %65, %65 : vector<16x128xf32>
    %cst_28 = arith.constant dense<0.000000e+00> : vector<16xf32>
    %67 = vector.multi_reduction <add>, %66, %cst_28 [1] : vector<16x128xf32> to vector<16xf32>
    %68 = vector.shape_cast %67 : vector<16xf32> to vector<16x1xf32>
    %cst_29 = arith.constant 3.125000e-02 : f32
    %69 = vector.broadcast %cst_29 : f32 to vector<16x1xf32>
    %70 = arith.mulf %68, %69 : vector<16x1xf32>
    %cst_30 = arith.constant 9.99999974E-6 : f32
    %71 = vector.broadcast %cst_30 : f32 to vector<16x1xf32>
    %72 = arith.addf %70, %71 : vector<16x1xf32>
    %73 = math.rsqrt %72 : vector<16x1xf32>
    %74 = vector.broadcast %73 : vector<16x1xf32> to vector<16x128xf32>
    %75 = arith.mulf %65, %74 : vector<16x128xf32>
    %c0_31 = arith.constant 0 : index
    %c0_32 = arith.constant 0 : index
    %76 = vector.load %arg9[%c0_31, %c0_32] : memref<1x128xf32, #tpu.memory_space<vmem>>, vector<1x128xf32>
    %77 = vector.broadcast %76 : vector<1x128xf32> to vector<16x128xf32>
    %78 = arith.mulf %75, %77 : vector<16x128xf32>
    %c0_33 = arith.constant 0 : index
    %c0_34 = arith.constant 0 : index
    %79 = vector.load %arg10[%c0_33, %c0_34] : memref<1x128xf32, #tpu.memory_space<vmem>>, vector<1x128xf32>
    %80 = vector.broadcast %79 : vector<1x128xf32> to vector<16x128xf32>
    %81 = arith.addf %78, %80 : vector<16x128xf32>
    %c0_35 = arith.constant 0 : index
    %c0_36 = arith.constant 0 : index
    %82 = vector.load %arg11[%c0_35, %c0_36] : memref<16x128xf32, #tpu.memory_space<vmem>>, vector<16x128xf32>
    tpu.vector_store %arg11[%c0_35, %c0_36], %81 {strides = array<i32>} : memref<16x128xf32, #tpu.memory_space<vmem>>, vector<16x128xf32>,
    return
  }
  func.func @transform_0(%arg0: i32) -> (i32, i32) {
    %c0_i32 = arith.constant 0 : i32
    %c0_i32_0 = arith.constant 0 : i32
    return %arg0, %c0_i32 : i32, i32
  }
  func.func @transform_1(%arg0: i32) -> (i32, i32) {
    %c0_i32 = arith.constant 0 : i32
    %c0_i32_0 = arith.constant 0 : i32
    return %arg0, %c0_i32 : i32, i32
  }
  func.func @transform_2(%arg0: i32) -> (i32, i32) {
    %c0_i32 = arith.constant 0 : i32
    %c0_i32_0 = arith.constant 0 : i32
    return %arg0, %c0_i32 : i32, i32
  }
  func.func @transform_3(%arg0: i32) -> (i32, i32) {
    %c0_i32 = arith.constant 0 : i32
    %c0_i32_0 = arith.constant 0 : i32
    %c0_i32_1 = arith.constant 0 : i32
    return %c0_i32, %c0_i32_0 : i32, i32
  }
  func.func @transform_4(%arg0: i32) -> (i32, i32) {
    %c0_i32 = arith.constant 0 : i32
    %c0_i32_0 = arith.constant 0 : i32
    %c0_i32_1 = arith.constant 0 : i32
    return %c0_i32, %c0_i32_0 : i32, i32
  }
  func.func @transform_5(%arg0: i32) -> (i32, i32) {
    %c0_i32 = arith.constant 0 : i32
    %c0_i32_0 = arith.constant 0 : i32
    %c0_i32_1 = arith.constant 0 : i32
    return %c0_i32, %c0_i32_0 : i32, i32
  }
  func.func @transform_6(%arg0: i32) -> (i32, i32) {
    %c0_i32 = arith.constant 0 : i32
    %c0_i32_0 = arith.constant 0 : i32
    %c0_i32_1 = arith.constant 0 : i32
    return %c0_i32, %c0_i32_0 : i32, i32
  }
  func.func @transform_7(%arg0: i32) -> (i32, i32) {
    %c0_i32 = arith.constant 0 : i32
    %c0_i32_0 = arith.constant 0 : i32
    %c0_i32_1 = arith.constant 0 : i32
    return %c0_i32, %c0_i32_0 : i32, i32
  }
  func.func @transform_8(%arg0: i32) -> (i32, i32) {
    %c0_i32 = arith.constant 0 : i32
    %c0_i32_0 = arith.constant 0 : i32
    %c0_i32_1 = arith.constant 0 : i32
    return %c0_i32, %c0_i32_0 : i32, i32
  }
  func.func @transform_9(%arg0: i32) -> (i32, i32) {
    %c0_i32 = arith.constant 0 : i32
    %c0_i32_0 = arith.constant 0 : i32
    %c0_i32_1 = arith.constant 0 : i32
    return %c0_i32, %c0_i32_0 : i32, i32
  }
  func.func @transform_10(%arg0: i32) -> (i32, i32) {
    %c0_i32 = arith.constant 0 : i32
    %c0_i32_0 = arith.constant 0 : i32
    return %arg0, %c0_i32 : i32, i32
  }
}

</mosaic_0001>

<llo_original>
// kernel: tpu_custom_call.1
$region0: #{tpu_custom_call.1}
  #allocation0 [shape = 'u32[]', space=smem, size = 0x4, offset = 0x4, fixed_abs, tag = 'smem constant byte address 0x4 - core index']
  #allocation1 [shape = 'u32[72,128]{1,0:T(1,128)}', space=vmem, size = 0x9000, scoped, tag = 'internal scratch']
  %s0 = inlined_call_operand.hbm [shape: f32[16,128], index: 0, kind: input, shape index: {}]
  %s1 = inlined_call_operand.hbm [shape: bf16[16,128], index: 1, kind: input, shape index: {}]
  %s2 = inlined_call_operand.hbm [shape: bf16[16,128], index: 2, kind: input, shape index: {}]
  %s3 = inlined_call_operand.hbm [shape: bf16[128,256], index: 3, kind: input, shape index: {}]
  %s4 = inlined_call_operand.hbm [shape: bf16[128,256], index: 4, kind: input, shape index: {}]
  %s5 = inlined_call_operand.hbm [shape: bf16[128,256], index: 5, kind: input, shape index: {}]
  %s6 = inlined_call_operand.vmem [shape: f32[1,256], index: 6, kind: input, shape index: {}]
  %s7 = inlined_call_operand.vmem [shape: f32[1,256], index: 7, kind: input, shape index: {}]
  %s8 = inlined_call_operand.vmem [shape: f32[1,128], index: 8, kind: input, shape index: {}]
  %s9 = inlined_call_operand.vmem [shape: f32[1,128], index: 9, kind: input, shape index: {}]
  %s10 = inlined_call_operand.hbm [shape: f32[16,128], index: 10, kind: output, shape index: {}]
  %s11 = sld [smem:[#allocation0]]
  $region74: #{tpu_custom_call.1} parent=0
    _
  %s13 = ssub.s32 1, %s11
  %s14 = scalar_select 0, %s13, %s11
  $region1: #{tpu_custom_call.1} parent=0
    #allocation2 [shape = 'u8[8192]{0}', space=vmem, size = 0x2000, scoped, tag = 'input window, operand 0, single buffered']
    #allocation3 [shape = 's32[1]{0}', space=sflag, size = 0x4, scoped, tag = 'scoped memory for tpu_custom_call.1']
    #allocation4 [shape = 's32[1]{0}', space=sflag, size = 0x4, scoped, tag = 'scoped memory for tpu_custom_call.1']
    #allocation5 [shape = 'u8[4096]{0}', space=vmem, size = 0x1000, scoped, tag = 'input window, operand 1, single buffered']
    #allocation6 [shape = 's32[1]{0}', space=sflag, size = 0x4, scoped, tag = 'scoped memory for tpu_custom_call.1']
    #allocation7 [shape = 'u8[4096]{0}', space=vmem, size = 0x1000, scoped, tag = 'input window, operand 2, single buffered']
    #allocation8 [shape = 'u8[65536]{0}', space=vmem, size = 0x10000, scoped, tag = 'input window, operand 3, single buffered']
    #allocation9 [shape = 's32[1]{0}', space=sflag, size = 0x4, scoped, tag = 'scoped memory for tpu_custom_call.1']
    #allocation10 [shape = 'u8[65536]{0}', space=vmem, size = 0x10000, scoped, tag = 'input window, operand 4, single buffered']
    #allocation11 [shape = 'u8[65536]{0}', space=vmem, size = 0x10000, scoped, tag = 'input window, operand 5, single buffered']
    #allocation12 [shape = 's32[1]{0}', space=sflag, size = 0x4, scoped, tag = 'scoped memory for tpu_custom_call.1']
    #allocation13 [shape = 'u8[8192]{0}', space=vmem, size = 0x2000, scoped, tag = 'output window, operand 0, single buffered']
    %15 = vsyncpa [#allocation3], 0
    %16 = vsyncpa [#allocation6], 0
    %17 = vsyncpa [#allocation9], 0
    %18 = vsyncpa [#allocation12], 0
    %19 = vsyncpa [#allocation4], 0
    // Predicated region
    $region2: #{tpu_custom_call.1} parent=1 // pred_check
      _
    $region3: #{tpu_custom_call.1} parent=1 // pred_check_branch
      %21 = sbr.rel (0) target = $region5
    $region4: #{tpu_custom_call.1} parent=1 // pred_region
      %23 = vsyncadd [#allocation3], 0
      %s24 = sshll.u32 %s0, 4
      %s25 = int_to_ptr.hbm [resolvable:$true] %s24
      %s26 = sshll.u32 [#allocation2], 4
      %s27 = int_to_ptr.vmem [resolvable:$true] %s26
      %32 = dma.hbm_to_vmem [thread:$0]  %s25, 256, %s27, [#allocation3], 128, 128, 8
    $region5: #{tpu_custom_call.1} parent=1 // pred_fallthru
      _
    // Predicated region
    $region6: #{tpu_custom_call.1} parent=1 // pred_check
      _
    $region7: #{tpu_custom_call.1} parent=1 // pred_check_branch
      %34 = sbr.rel (0) target = $region9
    $region8: #{tpu_custom_call.1} parent=1 // pred_region
      %36 = vsyncadd [#allocation6], 0
      %s37 = sshll.u32 %s1, 4
      %s38 = int_to_ptr.hbm [resolvable:$true] %s37
      %s39 = sshll.u32 [#allocation5], 4
      %s40 = int_to_ptr.vmem [resolvable:$true] %s39
      %45 = dma.hbm_to_vmem [thread:$0]  %s38, 128, %s40, [#allocation6], 64, 64, 4
    $region9: #{tpu_custom_call.1} parent=1 // pred_fallthru
      _
    // Predicated region
    $region10: #{tpu_custom_call.1} parent=1 // pred_check
      _
    $region11: #{tpu_custom_call.1} parent=1 // pred_check_branch
      %47 = sbr.rel (0) target = $region13
    $region12: #{tpu_custom_call.1} parent=1 // pred_region
      %49 = vsyncadd [#allocation6], 0
      %s50 = sshll.u32 %s2, 4
      %s51 = int_to_ptr.hbm [resolvable:$true] %s50
      %s52 = sshll.u32 [#allocation7], 4
      %s53 = int_to_ptr.vmem [resolvable:$true] %s52
      %58 = dma.hbm_to_vmem [thread:$0]  %s51, 128, %s53, [#allocation6], 64, 64, 4
    $region13: #{tpu_custom_call.1} parent=1 // pred_fallthru
      _
    // Predicated region
    $region14: #{tpu_custom_call.1} parent=1 // pred_check
      _
    $region15: #{tpu_custom_call.1} parent=1 // pred_check_branch
      %60 = sbr.rel (0) target = $region17
    $region16: #{tpu_custom_call.1} parent=1 // pred_region
      %62 = vsyncadd [#allocation9], 0
      %s63 = sshll.u32 %s3, 4
      %s64 = int_to_ptr.hbm [resolvable:$true] %s63
      %s65 = sshll.u32 [#allocation8], 4
      %s66 = int_to_ptr.vmem [resolvable:$true] %s65
      %71 = dma.hbm_to_vmem [thread:$0]  %s64, 2048, %s66, [#allocation9], 128, 128, 8
    $region17: #{tpu_custom_call.1} parent=1 // pred_fallthru
      _
    // Predicated region
    $region18: #{tpu_custom_call.1} parent=1 // pred_check
      _
    $region19: #{tpu_custom_call.1} parent=1 // pred_check_branch
      %73 = sbr.rel (0) target = $region21
    $region20: #{tpu_custom_call.1} parent=1 // pred_region
      %75 = vsyncadd [#allocation9], 0
      %s76 = sshll.u32 %s4, 4
      %s77 = int_to_ptr.hbm [resolvable:$true] %s76
      %s78 = sshll.u32 [#allocation10], 4
      %s79 = int_to_ptr.vmem [resolvable:$true] %s78
      %84 = dma.hbm_to_vmem [thread:$0]  %s77, 2048, %s79, [#allocation9], 128, 128, 8
    $region21: #{tpu_custom_call.1} parent=1 // pred_fallthru
      _
    // Predicated region
    $region22: #{tpu_custom_call.1} parent=1 // pred_check
      _
    $region23: #{tpu_custom_call.1} parent=1 // pred_check_branch
      %86 = sbr.rel (0) target = $region25
    $region24: #{tpu_custom_call.1} parent=1 // pred_region
      %88 = vsyncadd [#allocation12], 0
      %s89 = sshll.u32 %s5, 4
      %s90 = int_to_ptr.hbm [resolvable:$true] %s89
      %s91 = sshll.u32 [#allocation11], 4
      %s92 = int_to_ptr.vmem [resolvable:$true] %s91
      %97 = dma.hbm_to_vmem [thread:$0]  %s90, 2048, %s92, [#allocation12], 128, 128, 8
    $region25: #{tpu_custom_call.1} parent=1 // pred_fallthru
      _
    // Predicated region
    $region26: #{tpu_custom_call.1} parent=1 // pred_check
      _
    $region27: #{tpu_custom_call.1} parent=1 // pred_check_branch
      %99 = sbr.rel (0) target = $region29
    $region28: #{tpu_custom_call.1} parent=1 // pred_region
      _
    $region29: #{tpu_custom_call.1} parent=1 // pred_fallthru
      _
    // Predicated region
    $region30: #{tpu_custom_call.1} parent=1 // pred_check
      _
    $region31: #{tpu_custom_call.1} parent=1 // pred_check_branch
      %101 = sbr.rel (0) target = $region33
    $region32: #{tpu_custom_call.1} parent=1 // pred_region
      _
    $region33: #{tpu_custom_call.1} parent=1 // pred_fallthru
      _
    // Predicated region
    $region34: #{tpu_custom_call.1} parent=1 // pred_check
      _
    $region35: #{tpu_custom_call.1} parent=1 // pred_check_branch
      %103 = sbr.rel (0) target = $region37
    $region36: #{tpu_custom_call.1} parent=1 // pred_region
      _
    $region37: #{tpu_custom_call.1} parent=1 // pred_fallthru
      _
    // Predicated region
    $region38: #{tpu_custom_call.1} parent=1 // pred_check
      _
    $region39: #{tpu_custom_call.1} parent=1 // pred_check_branch
      %105 = sbr.rel (0) target = $region41
    $region40: #{tpu_custom_call.1} parent=1 // pred_region
      _
    $region41: #{tpu_custom_call.1} parent=1 // pred_fallthru
      _
    // Predicated region
    $region42: #{tpu_custom_call.1} parent=1 // pred_check
      _
    $region43: #{tpu_custom_call.1} parent=1 // pred_check_branch
      %107 = sbr.rel (0) target = $region45
    $region44: #{tpu_custom_call.1} parent=1 // pred_region
      %109 = dma.done [#allocation3], 256
    $region45: #{tpu_custom_call.1} parent=1 // pred_fallthru
      _
    // Predicated region
    $region46: #{tpu_custom_call.1} parent=1 // pred_check
      _
    $region47: #{tpu_custom_call.1} parent=1 // pred_check_branch
      %111 = sbr.rel (0) target = $region49
    $region48: #{tpu_custom_call.1} parent=1 // pred_region
      %113 = dma.done [#allocation6], 128
    $region49: #{tpu_custom_call.1} parent=1 // pred_fallthru
      _
    // Predicated region
    $region50: #{tpu_custom_call.1} parent=1 // pred_check
      _
    $region51: #{tpu_custom_call.1} parent=1 // pred_check_branch
      %115 = sbr.rel (0) target = $region53
    $region52: #{tpu_custom_call.1} parent=1 // pred_region
      %117 = dma.done [#allocation6], 128
    $region53: #{tpu_custom_call.1} parent=1 // pred_fallthru
      _
    // Predicated region
    $region54: #{tpu_custom_call.1} parent=1 // pred_check
      _
    $region55: #{tpu_custom_call.1} parent=1 // pred_check_branch
      %119 = sbr.rel (0) target = $region57
    $region56: #{tpu_custom_call.1} parent=1 // pred_region
      %121 = dma.done [#allocation9], 2048
    $region57: #{tpu_custom_call.1} parent=1 // pred_fallthru
      _
    // Predicated region
    $region58: #{tpu_custom_call.1} parent=1 // pred_check
      _
    $region59: #{tpu_custom_call.1} parent=1 // pred_check_branch
      %123 = sbr.rel (0) target = $region61
    $region60: #{tpu_custom_call.1} parent=1 // pred_region
      %125 = dma.done [#allocation9], 2048
    $region61: #{tpu_custom_call.1} parent=1 // pred_fallthru
      _
    // Predicated region
    $region62: #{tpu_custom_call.1} parent=1 // pred_check
      _
    $region63: #{tpu_custom_call.1} parent=1 // pred_check_branch
      %127 = sbr.rel (0) target = $region65
    $region64: #{tpu_custom_call.1} parent=1 // pred_region
      %129 = dma.done [#allocation12], 2048
    $region65: #{tpu_custom_call.1} parent=1 // pred_fallthru
      _
    %v130 = vld [vmem:[#allocation2] sm:$0xff]
    %v131 = vld [vmem:[#allocation2 + $0x8] sm:$0xff]
    %v132 = vpack.c.bf16 %v131, %v130
    %v133 = vld [vmem:[#allocation8] sm:$0xff]
    %v134 = vld [vmem:[#allocation8 + $0x8] sm:$0xff]
    %v135 = vld [vmem:[#allocation8 + $0x10] sm:$0xff]
    %v136 = vld [vmem:[#allocation8 + $0x18] sm:$0xff]
    %v137 = vld [vmem:[#allocation8 + $0x20] sm:$0xff]
    %v138 = vld [vmem:[#allocation8 + $0x28] sm:$0xff]
    %v139 = vld [vmem:[#allocation8 + $0x30] sm:$0xff]
    %v140 = vld [vmem:[#allocation8 + $0x38] sm:$0xff]
    %v141 = vld [vmem:[#allocation8 + $0x40] sm:$0xff]
    %v142 = vld [vmem:[#allocation8 + $0x48] sm:$0xff]
    %v143 = vld [vmem:[#allocation8 + $0x50] sm:$0xff]
    %v144 = vld [vmem:[#allocation8 + $0x58] sm:$0xff]
    %v145 = vld [vmem:[#allocation8 + $0x60] sm:$0xff]
    %v146 = vld [vmem:[#allocation8 + $0x68] sm:$0xff]
    %v147 = vld [vmem:[#allocation8 + $0x70] sm:$0xff]
    %v148 = vld [vmem:[#allocation8 + $0x78] sm:$0xff]
    %v165 = vunpack.c.l.b16 %v133
    %v166 = vunpack.c.h.b16 %v133
    %v167 = vunpack.c.l.b16 %v134
    %v168 = vunpack.c.h.b16 %v134
    %v169 = vunpack.c.l.b16 %v135
    %v170 = vunpack.c.h.b16 %v135
    %v171 = vunpack.c.l.b16 %v136
    %v172 = vunpack.c.h.b16 %v136
    %v173 = vunpack.c.l.b16 %v137
    %v174 = vunpack.c.h.b16 %v137
    %v175 = vunpack.c.l.b16 %v138
    %v176 = vunpack.c.h.b16 %v138
    %v177 = vunpack.c.l.b16 %v139
    %v178 = vunpack.c.h.b16 %v139
    %v179 = vunpack.c.l.b16 %v140
    %v180 = vunpack.c.h.b16 %v140
    %v181 = vunpack.c.l.b16 %v141
    %v182 = vunpack.c.h.b16 %v141
    %v183 = vunpack.c.l.b16 %v142
    %v184 = vunpack.c.h.b16 %v142
    %v185 = vunpack.c.l.b16 %v143
    %v186 = vunpack.c.h.b16 %v143
    %v187 = vunpack.c.l.b16 %v144
    %v188 = vunpack.c.h.b16 %v144
    %v189 = vunpack.c.l.b16 %v145
    %v190 = vunpack.c.h.b16 %v145
    %v191 = vunpack.c.l.b16 %v146
    %v192 = vunpack.c.h.b16 %v146
    %v193 = vunpack.c.l.b16 %v147
    %v194 = vunpack.c.h.b16 %v147
    %v195 = vunpack.c.l.b16 %v148
    %v196 = vunpack.c.h.b16 %v148
    %v197 = vpack.c.b16 %v167, %v165
    %v198 = vpack.c.b16 %v168, %v166
    %v199 = vpack.c.b16 %v171, %v169
    %v200 = vpack.c.b16 %v172, %v170
    %v201 = vpack.c.b16 %v175, %v173
    %v202 = vpack.c.b16 %v176, %v174
    %v203 = vpack.c.b16 %v179, %v177
    %v204 = vpack.c.b16 %v180, %v178
    %v205 = vpack.c.b16 %v183, %v181
    %v206 = vpack.c.b16 %v184, %v182
    %v207 = vpack.c.b16 %v187, %v185
    %v208 = vpack.c.b16 %v188, %v186
    %v209 = vpack.c.b16 %v191, %v189
    %v210 = vpack.c.b16 %v192, %v190
    %v211 = vpack.c.b16 %v195, %v193
    %v212 = vpack.c.b16 %v196, %v194
    %229 = vmatpush.bf16.msra.mxu0 %v211
    %230 = vmatpush.bf16.msra.mxu0 %v209
    %231 = vmatpush.bf16.msra.mxu0 %v207
    %232 = vmatpush.bf16.msra.mxu0 %v205
    %233 = vmatpush.bf16.msra.mxu0 %v203
    %234 = vmatpush.bf16.msra.mxu0 %v201
    %235 = vmatpush.bf16.msra.mxu0 %v199
    %236 = vmatpush.bf16.msra.mxu0 %v197
    %237 = vmatmul.bf16.gmra.mxu0 %v132
    %v238 = vpop.f32.mrf.mxu0
    %v239 = vadd.f32 0.0, %v238
    %v240 = vpop.f32.mrf.mxu0
    %v241 = vadd.f32 0.0, %v240
    %242 = vdwg.mxu0
    %243 = vmatpush.bf16.msra.mxu0 %v212
    %244 = vmatpush.bf16.msra.mxu0 %v210
    %245 = vmatpush.bf16.msra.mxu0 %v208
    %246 = vmatpush.bf16.msra.mxu0 %v206
    %247 = vmatpush.bf16.msra.mxu0 %v204
    %248 = vmatpush.bf16.msra.mxu0 %v202
    %249 = vmatpush.bf16.msra.mxu0 %v200
    %250 = vmatpush.bf16.msra.mxu0 %v198
    %251 = vmatmul.bf16.gmra.mxu0 %v132
    %v252 = vpop.f32.mrf.mxu0
    %v253 = vadd.f32 0.0, %v252
    %v254 = vpop.f32.mrf.mxu0
    %v255 = vadd.f32 0.0, %v254
    %256 = vdwg.mxu0
    %v257 = vld [vmem:[#allocation5] sm:$0xf]
    %v258 = vld [vmem:[#allocation5 + $0x4] sm:$0xf]
    %v259 = vld [vmem:[#allocation10] sm:$0xff]
    %v260 = vld [vmem:[#allocation10 + $0x8] sm:$0xff]
    %v261 = vld [vmem:[#allocation10 + $0x10] sm:$0xff]
    %v262 = vld [vmem:[#allocation10 + $0x18] sm:$0xff]
    %v263 = vld [vmem:[#allocation10 + $0x20] sm:$0xff]
    %v264 = vld [vmem:[#allocation10 + $0x28] sm:$0xff]
    %v265 = vld [vmem:[#allocation10 + $0x30] sm:$0xff]
    %v266 = vld [vmem:[#allocation10 + $0x38] sm:$0xff]
    %v267 = vld [vmem:[#allocation10 + $0x40] sm:$0xff]
    %v268 = vld [vmem:[#allocation10 + $0x48] sm:$0xff]
    %v269 = vld [vmem:[#allocation10 + $0x50] sm:$0xff]
    %v270 = vld [vmem:[#allocation10 + $0x58] sm:$0xff]
    %v271 = vld [vmem:[#allocation10 + $0x60] sm:$0xff]
    %v272 = vld [vmem:[#allocation10 + $0x68] sm:$0xff]
    %v273 = vld [vmem:[#allocation10 + $0x70] sm:$0xff]
    %v274 = vld [vmem:[#allocation10 + $0x78] sm:$0xff]
    %v275 = vld [vmem:[%s6] sm:$0x3]
    %v277 = vperm.slane %v275, 0
    %v278 = vperm.slane %v275, 1
    %v283 = vunpack.c.l.b16 %v257
    %v284 = vunpack.c.l.b16 %v258
    %v285 = vpack.c.b16 %v284, %v283
    %v303 = vunpack.c.l.b16 %v259
    %v304 = vunpack.c.h.b16 %v259
    %v305 = vunpack.c.l.b16 %v260
    %v306 = vunpack.c.h.b16 %v260
    %v307 = vunpack.c.l.b16 %v261
    %v308 = vunpack.c.h.b16 %v261
    %v309 = vunpack.c.l.b16 %v262
    %v310 = vunpack.c.h.b16 %v262
    %v311 = vunpack.c.l.b16 %v263
    %v312 = vunpack.c.h.b16 %v263
    %v313 = vunpack.c.l.b16 %v264
    %v314 = vunpack.c.h.b16 %v264
    %v315 = vunpack.c.l.b16 %v265
    %v316 = vunpack.c.h.b16 %v265
    %v317 = vunpack.c.l.b16 %v266
    %v318 = vunpack.c.h.b16 %v266
    %v319 = vunpack.c.l.b16 %v267
    %v320 = vunpack.c.h.b16 %v267
    %v321 = vunpack.c.l.b16 %v268
    %v322 = vunpack.c.h.b16 %v268
    %v323 = vunpack.c.l.b16 %v269
    %v324 = vunpack.c.h.b16 %v269
    %v325 = vunpack.c.l.b16 %v270
    %v326 = vunpack.c.h.b16 %v270
    %v327 = vunpack.c.l.b16 %v271
    %v328 = vunpack.c.h.b16 %v271
    %v329 = vunpack.c.l.b16 %v272
    %v330 = vunpack.c.h.b16 %v272
    %v331 = vunpack.c.l.b16 %v273
    %v332 = vunpack.c.h.b16 %v273
    %v333 = vunpack.c.l.b16 %v274
    %v334 = vunpack.c.h.b16 %v274
    %v335 = vpack.c.b16 %v305, %v303
    %v336 = vpack.c.b16 %v306, %v304
    %v337 = vpack.c.b16 %v309, %v307
    %v338 = vpack.c.b16 %v310, %v308
    %v339 = vpack.c.b16 %v313, %v311
    %v340 = vpack.c.b16 %v314, %v312
    %v341 = vpack.c.b16 %v317, %v315
    %v342 = vpack.c.b16 %v318, %v316
    %v343 = vpack.c.b16 %v321, %v319
    %v344 = vpack.c.b16 %v322, %v320
    %v345 = vpack.c.b16 %v325, %v323
    %v346 = vpack.c.b16 %v326, %v324
    %v347 = vpack.c.b16 %v329, %v327
    %v348 = vpack.c.b16 %v330, %v328
    %v349 = vpack.c.b16 %v333, %v331
    %v350 = vpack.c.b16 %v334, %v332
    %367 = vmatpush.bf16.msra.mxu0 %v349
    %368 = vmatpush.bf16.msra.mxu0 %v347
    %369 = vmatpush.bf16.msra.mxu0 %v345
    %370 = vmatpush.bf16.msra.mxu0 %v343
    %371 = vmatpush.bf16.msra.mxu0 %v341
    %372 = vmatpush.bf16.msra.mxu0 %v339
    %373 = vmatpush.bf16.msra.mxu0 %v337
    %374 = vmatpush.bf16.msra.mxu0 %v335
    %375 = vmatmul.bf16.gmra.mxu0 %v285
    %v376 = vpop.f32.mrf.mxu0
    %v377 = vadd.f32 %v277, %v376
    %v378 = vpop.f32.mrf.mxu0
    %v379 = vadd.f32 %v277, %v378
    %380 = vdwg.mxu0
    %381 = vmatpush.bf16.msra.mxu0 %v350
    %382 = vmatpush.bf16.msra.mxu0 %v348
    %383 = vmatpush.bf16.msra.mxu0 %v346
    %384 = vmatpush.bf16.msra.mxu0 %v344
    %385 = vmatpush.bf16.msra.mxu0 %v342
    %386 = vmatpush.bf16.msra.mxu0 %v340
    %387 = vmatpush.bf16.msra.mxu0 %v338
    %388 = vmatpush.bf16.msra.mxu0 %v336
    %389 = vmatmul.bf16.gmra.mxu0 %v285
    %v390 = vpop.f32.mrf.mxu0
    %v391 = vadd.f32 %v278, %v390
    %v392 = vpop.f32.mrf.mxu0
    %v393 = vadd.f32 %v278, %v392
    %394 = vdwg.mxu0
    %v395 = vld [vmem:[#allocation7] sm:$0xf]
    %v396 = vld [vmem:[#allocation7 + $0x4] sm:$0xf]
    %v397 = vld [vmem:[#allocation11] sm:$0xff]
    %v398 = vld [vmem:[#allocation11 + $0x8] sm:$0xff]
    %v399 = vld [vmem:[#allocation11 + $0x10] sm:$0xff]
    %v400 = vld [vmem:[#allocation11 + $0x18] sm:$0xff]
    %v401 = vld [vmem:[#allocation11 + $0x20] sm:$0xff]
    %v402 = vld [vmem:[#allocation11 + $0x28] sm:$0xff]
    %v403 = vld [vmem:[#allocation11 + $0x30] sm:$0xff]
    %v404 = vld [vmem:[#allocation11 + $0x38] sm:$0xff]
    %v405 = vld [vmem:[#allocation11 + $0x40] sm:$0xff]
    %v406 = vld [vmem:[#allocation11 + $0x48] sm:$0xff]
    %v407 = vld [vmem:[#allocation11 + $0x50] sm:$0xff]
    %v408 = vld [vmem:[#allocation11 + $0x58] sm:$0xff]
    %v409 = vld [vmem:[#allocation11 + $0x60] sm:$0xff]
    %v410 = vld [vmem:[#allocation11 + $0x68] sm:$0xff]
    %v411 = vld [vmem:[#allocation11 + $0x70] sm:$0xff]
    %v412 = vld [vmem:[#allocation11 + $0x78] sm:$0xff]
    %v413 = vld [vmem:[%s7] sm:$0x3]
    %v415 = vperm.slane %v413, 0
    %v416 = vperm.slane %v413, 1
    %v421 = vunpack.c.l.b16 %v395
    %v422 = vunpack.c.l.b16 %v396
    %v423 = vpack.c.b16 %v422, %v421
    %v441 = vunpack.c.l.b16 %v397
    %v442 = vunpack.c.h.b16 %v397
    %v443 = vunpack.c.l.b16 %v398
    %v444 = vunpack.c.h.b16 %v398
    %v445 = vunpack.c.l.b16 %v399
    %v446 = vunpack.c.h.b16 %v399
    %v447 = vunpack.c.l.b16 %v400
    %v448 = vunpack.c.h.b16 %v400
    %v449 = vunpack.c.l.b16 %v401
    %v450 = vunpack.c.h.b16 %v401
    %v451 = vunpack.c.l.b16 %v402
    %v452 = vunpack.c.h.b16 %v402
    %v453 = vunpack.c.l.b16 %v403
    %v454 = vunpack.c.h.b16 %v403
    %v455 = vunpack.c.l.b16 %v404
    %v456 = vunpack.c.h.b16 %v404
    %v457 = vunpack.c.l.b16 %v405
    %v458 = vunpack.c.h.b16 %v405
    %v459 = vunpack.c.l.b16 %v406
    %v460 = vunpack.c.h.b16 %v406
    %v461 = vunpack.c.l.b16 %v407
    %v462 = vunpack.c.h.b16 %v407
    %v463 = vunpack.c.l.b16 %v408
    %v464 = vunpack.c.h.b16 %v408
    %v465 = vunpack.c.l.b16 %v409
    %v466 = vunpack.c.h.b16 %v409
    %v467 = vunpack.c.l.b16 %v410
    %v468 = vunpack.c.h.b16 %v410
    %v469 = vunpack.c.l.b16 %v411
    %v470 = vunpack.c.h.b16 %v411
    %v471 = vunpack.c.l.b16 %v412
    %v472 = vunpack.c.h.b16 %v412
    %v473 = vpack.c.b16 %v443, %v441
    %v474 = vpack.c.b16 %v444, %v442
    %v475 = vpack.c.b16 %v447, %v445
    %v476 = vpack.c.b16 %v448, %v446
    %v477 = vpack.c.b16 %v451, %v449
    %v478 = vpack.c.b16 %v452, %v450
    %v479 = vpack.c.b16 %v455, %v453
    %v480 = vpack.c.b16 %v456, %v454
    %v481 = vpack.c.b16 %v459, %v457
    %v482 = vpack.c.b16 %v460, %v458
    %v483 = vpack.c.b16 %v463, %v461
    %v484 = vpack.c.b16 %v464, %v462
    %v485 = vpack.c.b16 %v467, %v465
    %v486 = vpack.c.b16 %v468, %v466
    %v487 = vpack.c.b16 %v471, %v469
    %v488 = vpack.c.b16 %v472, %v470
    %505 = vmatpush.bf16.msra.mxu0 %v487
    %506 = vmatpush.bf16.msra.mxu0 %v485
    %507 = vmatpush.bf16.msra.mxu0 %v483
    %508 = vmatpush.bf16.msra.mxu0 %v481
    %509 = vmatpush.bf16.msra.mxu0 %v479
    %510 = vmatpush.bf16.msra.mxu0 %v477
    %511 = vmatpush.bf16.msra.mxu0 %v475
    %512 = vmatpush.bf16.msra.mxu0 %v473
    %513 = vmatmul.bf16.gmra.mxu0 %v423
    %v514 = vpop.f32.mrf.mxu0
    %v515 = vadd.f32 %v415, %v514
    %v516 = vpop.f32.mrf.mxu0
    %v517 = vadd.f32 %v415, %v516
    %518 = vdwg.mxu0
    %519 = vmatpush.bf16.msra.mxu0 %v488
    %520 = vmatpush.bf16.msra.mxu0 %v486
    %521 = vmatpush.bf16.msra.mxu0 %v484
    %522 = vmatpush.bf16.msra.mxu0 %v482
    %523 = vmatpush.bf16.msra.mxu0 %v480
    %524 = vmatpush.bf16.msra.mxu0 %v478
    %525 = vmatpush.bf16.msra.mxu0 %v476
    %526 = vmatpush.bf16.msra.mxu0 %v474
    %527 = vmatmul.bf16.gmra.mxu0 %v423
    %v528 = vpop.f32.mrf.mxu0
    %v529 = vadd.f32 %v416, %v528
    %v530 = vpop.f32.mrf.mxu0
    %v531 = vadd.f32 %v416, %v530
    %532 = vdwg.mxu0
    %v533 = vadd.f32 %v239, %v377
    %v534 = vadd.f32 %v241, %v379
    %v535 = vmax.f32 %v533, 0.0
    %v536 = vmax.f32 %v534, 0.0
    %v537 = vmul.f32 %v535, %v391
    %v538 = vmul.f32 %v536, %v393
    %v539 = vadd.f32 %v253, %v515
    %v540 = vadd.f32 %v255, %v517
    %v541 = vmax.f32 %v539, 0.0
    %v542 = vmax.f32 %v540, 0.0
    %v543 = vmul.f32 %v541, %v529
    %v544 = vmul.f32 %v542, %v531
    %v545 = vadd.f32 %v537, %v543
    %v546 = vadd.f32 %v538, %v544
    %v547 = vmul.f32 %v130, %v130
    %v548 = vmul.f32 %v131, %v131
    %549 = vadd.xlane.f32.xlu0 %v547
    %v550 = vpop.xlane.xlu0 %549
    %551 = vadd.xlane.f32.xlu0 %v548
    %v552 = vpop.xlane.xlu0 %551
    %v553 = vrsqrt.pop %v550
    %v554 = vmul.f32 %v553, %v550
    %v555 = vmul.f32 %v554, %v553
    %v556 = vmul.f32 0.5, %v555
    %v557 = vsub.f32 1.5, %v556
    %v558 = vmul.f32 %v553, %v557
    %v559 = vmul.f32 %v550, %v558
    %vm560 = vcmp.eq.f32.partialorder %v550, inf
    %v561 = vsel %vm560, %v550, %v559
    %vm562 = vcmp.eq.f32.partialorder %v550, 0.0
    %v563 = vand.u32 %v550, 2147483648
    %v564 = vsel %vm562, %v563, %v561
    %v565 = vrsqrt.pop %v552
    %v566 = vmul.f32 %v565, %v552
    %v567 = vmul.f32 %v566, %v565
    %v568 = vmul.f32 0.5, %v567
    %v569 = vsub.f32 1.5, %v568
    %v570 = vmul.f32 %v565, %v569
    %v571 = vmul.f32 %v552, %v570
    %vm572 = vcmp.eq.f32.partialorder %v552, inf
    %v573 = vsel %vm572, %v552, %v571
    %vm574 = vcmp.eq.f32.partialorder %v552, 0.0
    %v575 = vand.u32 %v552, 2147483648
    %v576 = vsel %vm574, %v575, %v573
    %v577 = vmul.f32 %v545, %v545
    %v578 = vmul.f32 %v546, %v546
    %579 = vadd.xlane.f32.xlu0 %v577
    %v580 = vpop.xlane.xlu0 %579
    %581 = vadd.xlane.f32.xlu0 %v578
    %v582 = vpop.xlane.xlu0 %581
    %v583 = vrsqrt.pop %v580
    %v584 = vmul.f32 %v583, %v580
    %v585 = vmul.f32 %v584, %v583
    %v586 = vmul.f32 0.5, %v585
    %v587 = vsub.f32 1.5, %v586
    %v588 = vmul.f32 %v583, %v587
    %v589 = vmul.f32 %v580, %v588
    %vm590 = vcmp.eq.f32.partialorder %v580, inf
    %v591 = vsel %vm590, %v580, %v589
    %vm592 = vcmp.eq.f32.partialorder %v580, 0.0
    %v593 = vand.u32 %v580, 2147483648
    %v594 = vsel %vm592, %v593, %v591
    %v595 = vrsqrt.pop %v582
    %v596 = vmul.f32 %v595, %v582
    %v597 = vmul.f32 %v596, %v595
    %v598 = vmul.f32 0.5, %v597
    %v599 = vsub.f32 1.5, %v598
    %v600 = vmul.f32 %v595, %v599
    %v601 = vmul.f32 %v582, %v600
    %vm602 = vcmp.eq.f32.partialorder %v582, inf
    %v603 = vsel %vm602, %v582, %v601
    %vm604 = vcmp.eq.f32.partialorder %v582, 0.0
    %v605 = vand.u32 %v582, 2147483648
    %v606 = vsel %vm604, %v605, %v603
    %vm607 = vcmp.eq.f32.partialorder %v594, 0.0
    %vm608 = vcmp.eq.f32.partialorder %v606, 0.0
    %v609 = vsel %vm607, 1.0, %v594
    %v610 = vsel %vm608, 1.0, %v606
    %v611 = vadd.f32 %v609, 1e-06
    %v612 = vadd.f32 %v610, 1e-06
    %v613 = vrcp.pop %v611
    %v614 = vmul.f32 %v611, %v613
    %v615 = vsub.f32 1.0, %v614
    %v616 = vmul.f32 %v613, %v615
    %v617 = vadd.f32 %v613, %v616
    %vm618 = vweird.f32 %v611
    %vm619 = vweird.f32 %v613
    %vm620 = vmor %vm618, %vm619
    %v621 = vsel %vm620, %v613, %v617
    %v622 = vand.u32 2147483647, %v611
    %vm623 = vcmp.eq.f32.partialorder %v622, 8.507059e+37
    %v624 = vand.u32 %v611, 2147483648
    %v625 = vor.u32 1.1754944e-38, %v624
    %v626 = vsel %vm623, %v625, %v621
    %v627 = vmul.f32 %v564, %v626
    %v628 = vrcp.pop %v612
    %v629 = vmul.f32 %v612, %v628
    %v630 = vsub.f32 1.0, %v629
    %v631 = vmul.f32 %v628, %v630
    %v632 = vadd.f32 %v628, %v631
    %vm633 = vweird.f32 %v612
    %vm634 = vweird.f32 %v628
    %vm635 = vmor %vm633, %vm634
    %v636 = vsel %vm635, %v628, %v632
    %v637 = vand.u32 2147483647, %v612
    %vm638 = vcmp.eq.f32.partialorder %v637, 8.507059e+37
    %v639 = vand.u32 %v612, 2147483648
    %v640 = vor.u32 1.1754944e-38, %v639
    %v641 = vsel %vm638, %v640, %v636
    %v642 = vmul.f32 %v576, %v641
    %v643 = vmul.f32 %v627, 0.5
    %v644 = vmul.f32 %v642, 0.5
    %v645 = vmin.f32 %v643, 1.0
    %v646 = vmin.f32 %v644, 1.0
    %v647 = vmul.f32 %v645, %v545
    %v648 = vmul.f32 %v646, %v546
    %v649 = vadd.f32 %v647, %v130
    %v650 = vadd.f32 %v648, %v131
    %651 = vadd.xlane.f32.xlu0 %v649
    %v652 = vpop.xlane.xlu0 %651
    %653 = vadd.xlane.f32.xlu0 %v650
    %v654 = vpop.xlane.xlu0 %653
    %v655 = vmul.f32 %v652, 0.03125
    %v656 = vmul.f32 %v654, 0.03125
    %v657 = vlaneseq
    %v658 = vand.u32 %v657, 127
    %vm659 = vcmp.lt.s32.totalorder %v658, 32
    %v660 = vsel %vm659, 1, 0
    %v661 = vcvt.s32.f32 %v660
    %v662 = vsub.f32 %v649, %v655
    %v663 = vsub.f32 %v650, %v656
    %v664 = vmul.f32 %v662, %v661
    %v665 = vmul.f32 %v663, %v661
    %v666 = vmul.f32 %v664, %v664
    %v667 = vmul.f32 %v665, %v665
    %668 = vadd.xlane.f32.xlu0 %v666
    %v669 = vpop.xlane.xlu0 %668
    %670 = vadd.xlane.f32.xlu0 %v667
    %v671 = vpop.xlane.xlu0 %670
    %v672 = vmul.f32 %v669, 0.03125
    %v673 = vmul.f32 %v671, 0.03125
    %v674 = vadd.f32 %v672, 1e-05
    %v675 = vadd.f32 %v673, 1e-05
    %v676 = vrsqrt.pop %v674
    %v677 = vmul.f32 %v676, %v674
    %v678 = vmul.f32 %v677, %v676
    %v679 = vmul.f32 0.5, %v678
    %v680 = vsub.f32 1.5, %v679
    %v681 = vmul.f32 %v676, %v680
    %vm682 = vweird.f32 %v674
    %vm683 = vweird.f32 %v676
    %vm684 = vmor %vm682, %vm683
    %v685 = vsel %vm684, %v676, %v681
    %v686 = vrsqrt.pop %v675
    %v687 = vmul.f32 %v686, %v675
    %v688 = vmul.f32 %v687, %v686
    %v689 = vmul.f32 0.5, %v688
    %v690 = vsub.f32 1.5, %v689
    %v691 = vmul.f32 %v686, %v690
    %vm692 = vweird.f32 %v675
    %vm693 = vweird.f32 %v686
    %vm694 = vmor %vm692, %vm693
    %v695 = vsel %vm694, %v686, %v691
    %v696 = vmul.f32 %v664, %v685
    %v697 = vmul.f32 %v665, %v695
    %v698 = vld [vmem:[%s8] sm:$0x1]
    %v700 = vperm.slane %v698, 0
    %v702 = vmul.f32 %v696, %v700
    %v703 = vmul.f32 %v697, %v700
    %v704 = vld [vmem:[%s9] sm:$0x1]
    %v706 = vperm.slane %v704, 0
    %v708 = vadd.f32 %v702, %v706
    %v709 = vadd.f32 %v703, %v706
    %710 = vst [vmem:[#allocation13] sm:$0xff] %v708
    %711 = vst [vmem:[#allocation13 + $0x8] sm:$0xff] %v709
    // Predicated region
    $region66: #{tpu_custom_call.1} parent=1 // pred_check
      _
    $region67: #{tpu_custom_call.1} parent=1 // pred_check_branch
      %713 = sbr.rel (0) target = $region69
    $region68: #{tpu_custom_call.1} parent=1 // pred_region
      %715 = vsyncadd [#allocation4], 0
      %s716 = sshll.u32 [#allocation13], 4
      %s717 = int_to_ptr.vmem [resolvable:$true] %s716
      %s718 = sshll.u32 %s10, 4
      %s719 = int_to_ptr.hbm [resolvable:$true] %s718
      %724 = dma.vmem_to_hbm [thread:$0]  %s717, 256, %s719, [#allocation4], 128, 128, 8
    $region69: #{tpu_custom_call.1} parent=1 // pred_fallthru
      _
    // Predicated region
    $region70: #{tpu_custom_call.1} parent=1 // pred_check
      _
    $region71: #{tpu_custom_call.1} parent=1 // pred_check_branch
      %726 = sbr.rel (0) target = $region73
    $region72: #{tpu_custom_call.1} parent=1 // pred_region
      %728 = dma.done [#allocation4], 256
    $region73: #{tpu_custom_call.1} parent=1 // pred_fallthru
      _
    %729 = vsyncpa [#allocation3], 1
    %730 = vsyncpa [#allocation6], 1
    %731 = vsyncpa [#allocation9], 1
    %732 = vsyncpa [#allocation12], 1
    %733 = vsyncpa [#allocation4], 1

</llo_original>
